<compile_context>
chip_gen: v7x
topology: tpu7x:2x2x1
jax: 0.10.0
libtpu: 0.0.40
codegen_flags: <defaults>
</compile_context>

<pallas_src>
import functools

import jax
import jax.numpy as jnp
from jax.experimental import pallas as pl
from jax.experimental.pallas import tpu as pltpu


_BLOCK_BYTE_CAP = 2 * 1024 * 1024  # per-buffer VMEM budget for the x / out blocks


def _round_up(n, m):
    return ((n + m - 1) // m) * m


def _padded_slice_bytes(C, L, itemsize):
    """Padded VMEM bytes of one (C, L) slice (sublane packing is dtype dependent)."""
    sublane_pack = max(8, 32 // itemsize)
    return _round_up(C, sublane_pack) * _round_up(L, 128) * itemsize


def _pick_batch_tile(B, C, L, itemsize, cap_bytes):
    """Largest divisor of B whose padded (TB, C, L) block fits cap; prefer >=2 grid steps."""
    slice_bytes = _padded_slice_bytes(C, L, itemsize)
    if slice_bytes > cap_bytes:
        return None                                   # even TB=1 does not fit -> two-pass path
    best = None
    for tb in range(B, 0, -1):
        if B % tb:
            continue
        if tb * slice_bytes > cap_bytes:
            continue
        if best is None:
            best = tb                                 # largest fitting divisor
        if B // tb >= 2:                              # prefer a tile that splits across 2 TCs
            return tb
    return best


# --------------------------------------------------------------------------------------
# Fused single-pass kernel: pooling + MLP + softmax + scale, x slab resident in VMEM.
# --------------------------------------------------------------------------------------
def _fused_kernel(x_ref, w1_ref, b1_ref, w2t_ref, b2_ref, o_ref):
    TB, C, L = x_ref.shape
    inv_l = 1.0 / L

    # ---- pooling: per-channel mean & max over L (2-D lane reductions, f32 accumulation) ----
    avg_cols, max_cols = [], []
    for c in range(C):                                    # static channel index
        xc = x_ref[:, c, :].astype(jnp.float32)           # (TB, L)
        avg_cols.append(jnp.sum(xc, axis=1, keepdims=True) * inv_l)   # (TB, 1)
        max_cols.append(jnp.max(xc, axis=1, keepdims=True))           # (TB, 1)
    avg = jnp.concatenate(avg_cols, axis=1)               # (TB, C)
    mx = jnp.concatenate(max_cols, axis=1)                # (TB, C)
    v = jnp.concatenate([avg, mx], axis=0)                # (2*TB, C): fc runs once for both

    # ---- fc1: relu(v @ w1 + b1) as C rank-1 VPU updates (too small for the MXU) ----
    h = None
    for c in range(C):
        t = v[:, c:c + 1] * w1_ref[c:c + 1, :]            # (2*TB, 1) * (1, H) -> (2*TB, H)
        h = t if h is None else h + t
    h = jnp.maximum(h + b1_ref[...], 0.0)                 # (2*TB, H)

    # ---- fc2: h @ w2 + b2, one lane reduction per output channel (w2 passed transposed) ----
    cols = [jnp.sum(h * w2t_ref[c:c + 1, :], axis=1, keepdims=True) for c in range(C)]
    lg = jnp.concatenate(cols, axis=1) + b2_ref[...]      # (2*TB, C)

    # ---- softmax over channels of fc(avg) + fc(max) ----
    logits = lg[:TB, :] + lg[TB:, :]                      # (TB, C)
    z = logits - jnp.max(logits, axis=1, keepdims=True)
    e = jnp.exp(z)
    att = e / jnp.sum(e, axis=1, keepdims=True)           # (TB, C), f32

    # ---- scale the resident slab and write out (no second HBM read of x) ----
    for c in range(C):
        xc = x_ref[:, c, :]                               # (TB, L), native dtype
        o_ref[:, c, :] = xc * att[:, c:c + 1].astype(xc.dtype)


def _channel_attention_fused(x, w1, b1, w2, b2, tb):
    B, C, L = x.shape
    w2t = w2.T                                            # (C, H): fc2 reads rows, not columns
    n_b = B // tb

    return pl.pallas_call(
        _fused_kernel,
        out_shape=jax.ShapeDtypeStruct((B, C, L), x.dtype),
        grid_spec=pltpu.PrefetchScalarGridSpec(
            num_scalar_prefetch=0,
            grid=(n_b,),
            in_specs=[
                pl.BlockSpec((tb, C, L), lambda i: (i, 0, 0)),
                pl.BlockSpec(w1.shape, lambda i: (0, 0)),        # (C, H), resident
                pl.BlockSpec((1, w1.shape[1]), lambda i: (0, 0)),
                pl.BlockSpec(w2t.shape, lambda i: (0, 0)),       # (C, H), resident
                pl.BlockSpec((1, C), lambda i: (0, 0)),
            ],
            out_specs=pl.BlockSpec((tb, C, L), lambda i: (i, 0, 0))),
        compiler_params=pltpu.CompilerParams(
            dimension_semantics=("parallel",),
            vmem_limit_bytes=32 * 1024 * 1024),
    )(x, w1, b1.reshape(1, -1), w2t, b2.reshape(1, -1))


# --------------------------------------------------------------------------------------
# Fallback two-pass path (only when one (C, L) slice exceeds the VMEM block budget).
# --------------------------------------------------------------------------------------
def _pool_kernel(x_ref, sum_ref, max_ref, *, l_total):
    # Grid: (row_tiles, L_tiles); L axis (axis 1, innermost) is the reduction axis.
    j = pl.program_id(1)

    @pl.when(j == 0)
    def _():
        sum_ref[...] = jnp.zeros_like(sum_ref)
        max_ref[...] = jnp.full_like(max_ref, -jnp.inf)

    TR, TL = x_ref.shape
    lane = jax.lax.broadcasted_iota(jnp.int32, (TR, TL), 1)
    valid = (j * TL + lane) < l_total                     # mask the ragged L tail
    xf = x_ref[...].astype(jnp.float32)
    sum_ref[...] += jnp.sum(jnp.where(valid, xf, 0.0), axis=1, keepdims=True)
    max_ref[...] = jnp.maximum(
        max_ref[...],
        jnp.max(jnp.where(valid, xf, -jnp.inf), axis=1, keepdims=True))


def _scale_kernel(x_ref, a_ref, o_ref):
    o_ref[...] = x_ref[...] * a_ref[...]


def _channel_attention_two_pass(x, w1, b1, w2, b2):
    B, C, L = x.shape
    BC = B * C
    x2 = x.reshape(BC, L)

    TR = 256 if BC >= 256 else BC                         # mult. of 8 (or full extent)
    TL = 512 if L >= 512 else L                           # mult. of 128 (or full extent)
    n_r, n_l = pl.cdiv(BC, TR), pl.cdiv(L, TL)

    # Pass 1: pooling (f32 sum + max over L), resident accumulators, masked tail.
    s, m = pl.pallas_call(
        functools.partial(_pool_kernel, l_total=L),
        out_shape=(jax.ShapeDtypeStruct((BC, 1), jnp.float32),
                   jax.ShapeDtypeStruct((BC, 1), jnp.float32)),
        grid_spec=pltpu.PrefetchScalarGridSpec(
            num_scalar_prefetch=0,
            grid=(n_r, n_l),
            in_specs=[pl.BlockSpec((TR, TL), lambda i, j: (i, j))],
            out_specs=[pl.BlockSpec((TR, 1), lambda i, j: (i, 0)),
                       pl.BlockSpec((TR, 1), lambda i, j: (i, 0))]),
        compiler_params=pltpu.CompilerParams(
            dimension_semantics=("parallel", "arbitrary"),
            vmem_limit_bytes=32 * 1024 * 1024),
    )(x2)

    # Tiny MLP + softmax in plain JAX ((2B, C) / (2B, 16C) shapes).
    avg = (s[:, 0] * (1.0 / L)).reshape(B, C)
    mx = m[:, 0].reshape(B, C)
    stacked = jnp.concatenate([avg, mx], axis=0)
    h = jnp.maximum(stacked @ w1 + b1.reshape(1, -1), 0.0)
    lg = h @ w2 + b2.reshape(1, -1)
    att = jax.nn.softmax(lg[:B] + lg[B:], axis=1)
    att_col = att.reshape(BC, 1).astype(x.dtype)

    # Pass 2: broadcast scale, fully parallel.
    out2 = pl.pallas_call(
        _scale_kernel,
        out_shape=jax.ShapeDtypeStruct((BC, L), x.dtype),
        grid_spec=pltpu.PrefetchScalarGridSpec(
            num_scalar_prefetch=0,
            grid=(n_r, n_l),
            in_specs=[pl.BlockSpec((TR, TL), lambda i, j: (i, j)),
                      pl.BlockSpec((TR, 1), lambda i, j: (i, 0))],
            out_specs=pl.BlockSpec((TR, TL), lambda i, j: (i, j))),
        compiler_params=pltpu.CompilerParams(
            dimension_semantics=("parallel", "parallel"),
            vmem_limit_bytes=32 * 1024 * 1024),
    )(x2, att_col)

    return out2.reshape(B, C, L)


# --------------------------------------------------------------------------------------
# Public entry point.
# --------------------------------------------------------------------------------------
def channel_attention(x, w1, b1, w2, b2):
    B, C, L = x.shape
    tb = _pick_batch_tile(B, C, L, x.dtype.itemsize, _BLOCK_BYTE_CAP)
    if tb is not None:
        return _channel_attention_fused(x, w1, b1, w2, b2, tb)
    return _channel_attention_two_pass(x, w1, b1, w2, b2)


def channel_attention_ref(x, w1, b1, w2, b2):
    # Pure-JAX reference mirroring the PyTorch forward (exact f32 matmuls).
    avg = jnp.mean(x, axis=2)
    mx = jnp.max(x, axis=2)

    def fc(v):
        h = jnp.maximum(jnp.dot(v, w1, precision=jax.lax.Precision.HIGHEST) + b1, 0.0)
        return jnp.dot(h, w2, precision=jax.lax.Precision.HIGHEST) + b2

    att = jax.nn.softmax(fc(avg) + fc(mx), axis=1)
    return x * att[:, :, None]


if __name__ == "__main__":
    B, C, L = 2, 4, 16          # dim = C = 4 -> hidden = dim * 16 = 64
    H = C * 16

    key = jax.random.PRNGKey(0)
    kx, kw1, kb1, kw2, kb2 = jax.random.split(key, 5)

    x = jax.random.normal(kx, (B, C, L), dtype=jnp.float32)

    # Deterministic synthetic params, PyTorch-Linear-style uniform init (fan_in based);
    # weights stored as (in_features, out_features) so y = v @ W + b matches nn.Linear.
    bound1 = float(1.0 / (C ** 0.5))
    w1 = jax.random.uniform(kw1, (C, H), jnp.float32, -bound1, bound1)
    b1 = jax.random.uniform(kb1, (1, H), jnp.float32, -bound1, bound1)
    bound2 = float(1.0 / (H ** 0.5))
    w2 = jax.random.uniform(kw2, (H, C), jnp.float32, -bound2, bound2)
    b2 = jax.random.uniform(kb2, (1, C), jnp.float32, -bound2, bound2)

    fn = jax.jit(channel_attention)
    out = fn(x, w1, b1, w2, b2)
    jax.block_until_ready(out)

    ref = channel_attention_ref(x, w1, b1, w2, b2)
    assert out.shape == (B, C, L)
    assert jnp.allclose(out, ref, atol=1e-5, rtol=1e-5), "Pallas kernel mismatch vs reference"

    print("KERNEL_OK")
</pallas_src>

<mosaic_0001>
module attributes {stable_mosaic.version = 11 : i64} {
  func.func @_fused_kernel(%arg0: i32, %arg1: memref<1x4x16xf32, #tpu.memory_space<vmem>>, %arg2: memref<4x64xf32, #tpu.memory_space<vmem>>, %arg3: memref<1x64xf32, #tpu.memory_space<vmem>>, %arg4: memref<4x64xf32, #tpu.memory_space<vmem>>, %arg5: memref<1x4xf32, #tpu.memory_space<vmem>>, %arg6: memref<1x4x16xf32, #tpu.memory_space<vmem>>) attributes {dimension_semantics = [#tpu.dimension_semantics<parallel>], iteration_bounds = array<i64: 2>, scalar_prefetch = 0 : i64, scratch_operands = 0 : i64, tpu.core_type = #tpu.core_type<tc>, window_params = [{transform_indices = @transform_0, window_bounds = array<i64: 1, 4, 16>}, {pipeline_mode = #tpu.pipeline_mode<synchronous>, transform_indices = @transform_1, window_bounds = array<i64: 4, 64>}, {pipeline_mode = #tpu.pipeline_mode<synchronous>, transform_indices = @transform_2, window_bounds = array<i64: 1, 64>}, {pipeline_mode = #tpu.pipeline_mode<synchronous>, transform_indices = @transform_3, window_bounds = array<i64: 4, 64>}, {pipeline_mode = #tpu.pipeline_mode<synchronous>, transform_indices = @transform_4, window_bounds = array<i64: 1, 4>}, {transform_indices = @transform_5, window_bounds = array<i64: 1, 4, 16>}]} {
    %c0 = arith.constant 0 : index
    %c0_0 = arith.constant 0 : index
    %c0_1 = arith.constant 0 : index
    %0 = vector.load %arg1[%c0, %c0_0, %c0_1] : memref<1x4x16xf32, #tpu.memory_space<vmem>>, vector<1x1x16xf32>
    %1 = vector.shape_cast %0 : vector<1x1x16xf32> to vector<1x16xf32>
    %cst = arith.constant dense<0.000000e+00> : vector<1xf32>
    %2 = vector.multi_reduction <add>, %1, %cst [1] : vector<1x16xf32> to vector<1xf32>
    %3 = vector.shape_cast %2 : vector<1xf32> to vector<1x1xf32>
    %cst_2 = arith.constant 6.250000e-02 : f32
    %4 = vector.broadcast %cst_2 : f32 to vector<1x1xf32>
    %5 = arith.mulf %3, %4 : vector<1x1xf32>
    %cst_3 = arith.constant dense<0xFF800000> : vector<1xf32>
    %6 = vector.multi_reduction <maximumf>, %1, %cst_3 [1] : vector<1x16xf32> to vector<1xf32>
    %7 = vector.shape_cast %6 : vector<1xf32> to vector<1x1xf32>
    %c0_4 = arith.constant 0 : index
    %c1 = arith.constant 1 : index
    %c0_5 = arith.constant 0 : index
    %8 = vector.load %arg1[%c0_4, %c1, %c0_5] : memref<1x4x16xf32, #tpu.memory_space<vmem>>, vector<1x1x16xf32>
    %9 = vector.shape_cast %8 : vector<1x1x16xf32> to vector<1x16xf32>
    %cst_6 = arith.constant dense<0.000000e+00> : vector<1xf32>
    %10 = vector.multi_reduction <add>, %9, %cst_6 [1] : vector<1x16xf32> to vector<1xf32>
    %11 = vector.shape_cast %10 : vector<1xf32> to vector<1x1xf32>
    %cst_7 = arith.constant 6.250000e-02 : f32
    %12 = vector.broadcast %cst_7 : f32 to vector<1x1xf32>
    %13 = arith.mulf %11, %12 : vector<1x1xf32>
    %cst_8 = arith.constant dense<0xFF800000> : vector<1xf32>
    %14 = vector.multi_reduction <maximumf>, %9, %cst_8 [1] : vector<1x16xf32> to vector<1xf32>
    %15 = vector.shape_cast %14 : vector<1xf32> to vector<1x1xf32>
    %c0_9 = arith.constant 0 : index
    %c2 = arith.constant 2 : index
    %c0_10 = arith.constant 0 : index
    %16 = vector.load %arg1[%c0_9, %c2, %c0_10] : memref<1x4x16xf32, #tpu.memory_space<vmem>>, vector<1x1x16xf32>
    %17 = vector.shape_cast %16 : vector<1x1x16xf32> to vector<1x16xf32>
    %cst_11 = arith.constant dense<0.000000e+00> : vector<1xf32>
    %18 = vector.multi_reduction <add>, %17, %cst_11 [1] : vector<1x16xf32> to vector<1xf32>
    %19 = vector.shape_cast %18 : vector<1xf32> to vector<1x1xf32>
    %cst_12 = arith.constant 6.250000e-02 : f32
    %20 = vector.broadcast %cst_12 : f32 to vector<1x1xf32>
    %21 = arith.mulf %19, %20 : vector<1x1xf32>
    %cst_13 = arith.constant dense<0xFF800000> : vector<1xf32>
    %22 = vector.multi_reduction <maximumf>, %17, %cst_13 [1] : vector<1x16xf32> to vector<1xf32>
    %23 = vector.shape_cast %22 : vector<1xf32> to vector<1x1xf32>
    %c0_14 = arith.constant 0 : index
    %c3 = arith.constant 3 : index
    %c0_15 = arith.constant 0 : index
    %24 = vector.load %arg1[%c0_14, %c3, %c0_15] : memref<1x4x16xf32, #tpu.memory_space<vmem>>, vector<1x1x16xf32>
    %25 = vector.shape_cast %24 : vector<1x1x16xf32> to vector<1x16xf32>
    %cst_16 = arith.constant dense<0.000000e+00> : vector<1xf32>
    %26 = vector.multi_reduction <add>, %25, %cst_16 [1] : vector<1x16xf32> to vector<1xf32>
    %27 = vector.shape_cast %26 : vector<1xf32> to vector<1x1xf32>
    %cst_17 = arith.constant 6.250000e-02 : f32
    %28 = vector.broadcast %cst_17 : f32 to vector<1x1xf32>
    %29 = arith.mulf %27, %28 : vector<1x1xf32>
    %cst_18 = arith.constant dense<0xFF800000> : vector<1xf32>
    %30 = vector.multi_reduction <maximumf>, %25, %cst_18 [1] : vector<1x16xf32> to vector<1xf32>
    %31 = vector.shape_cast %30 : vector<1xf32> to vector<1x1xf32>
    %32 = tpu.concatenate %5, %13, %21, %29 in 1 : vector<1x1xf32>, vector<1x1xf32>, vector<1x1xf32>, vector<1x1xf32> -> vector<1x4xf32>
    %33 = tpu.concatenate %7, %15, %23, %31 in 1 : vector<1x1xf32>, vector<1x1xf32>, vector<1x1xf32>, vector<1x1xf32> -> vector<1x4xf32>
    %34 = tpu.concatenate %32, %33 in 0 : vector<1x4xf32>, vector<1x4xf32> -> vector<2x4xf32>
    %35 = vector.extract_strided_slice %34 {offsets = [0, 0], sizes = [2, 1], strides = [1, 1]} : vector<2x4xf32> to vector<2x1xf32>
    %c0_19 = arith.constant 0 : index
    %c0_20 = arith.constant 0 : index
    %36 = vector.load %arg2[%c0_19, %c0_20] : memref<4x64xf32, #tpu.memory_space<vmem>>, vector<1x64xf32>
    %37 = vector.broadcast %35 : vector<2x1xf32> to vector<2x64xf32>
    %38 = vector.broadcast %36 : vector<1x64xf32> to vector<2x64xf32>
    %39 = arith.mulf %37, %38 : vector<2x64xf32>
    %40 = vector.extract_strided_slice %34 {offsets = [0, 1], sizes = [2, 1], strides = [1, 1]} : vector<2x4xf32> to vector<2x1xf32>
    %c1_21 = arith.constant 1 : index
    %c0_22 = arith.constant 0 : index
    %41 = vector.load %arg2[%c1_21, %c0_22] : memref<4x64xf32, #tpu.memory_space<vmem>>, vector<1x64xf32>
    %42 = vector.broadcast %40 : vector<2x1xf32> to vector<2x64xf32>
    %43 = vector.broadcast %41 : vector<1x64xf32> to vector<2x64xf32>
    %44 = arith.mulf %42, %43 : vector<2x64xf32>
    %45 = arith.addf %39, %44 : vector<2x64xf32>
    %46 = vector.extract_strided_slice %34 {offsets = [0, 2], sizes = [2, 1], strides = [1, 1]} : vector<2x4xf32> to vector<2x1xf32>
    %c2_23 = arith.constant 2 : index
    %c0_24 = arith.constant 0 : index
    %47 = vector.load %arg2[%c2_23, %c0_24] : memref<4x64xf32, #tpu.memory_space<vmem>>, vector<1x64xf32>
    %48 = vector.broadcast %46 : vector<2x1xf32> to vector<2x64xf32>
    %49 = vector.broadcast %47 : vector<1x64xf32> to vector<2x64xf32>
    %50 = arith.mulf %48, %49 : vector<2x64xf32>
    %51 = arith.addf %45, %50 : vector<2x64xf32>
    %52 = vector.extract_strided_slice %34 {offsets = [0, 3], sizes = [2, 1], strides = [1, 1]} : vector<2x4xf32> to vector<2x1xf32>
    %c3_25 = arith.constant 3 : index
    %c0_26 = arith.constant 0 : index
    %53 = vector.load %arg2[%c3_25, %c0_26] : memref<4x64xf32, #tpu.memory_space<vmem>>, vector<1x64xf32>
    %54 = vector.broadcast %52 : vector<2x1xf32> to vector<2x64xf32>
    %55 = vector.broadcast %53 : vector<1x64xf32> to vector<2x64xf32>
    %56 = arith.mulf %54, %55 : vector<2x64xf32>
    %57 = arith.addf %51, %56 : vector<2x64xf32>
    %c0_27 = arith.constant 0 : index
    %c0_28 = arith.constant 0 : index
    %58 = vector.load %arg3[%c0_27, %c0_28] : memref<1x64xf32, #tpu.memory_space<vmem>>, vector<1x64xf32>
    %59 = vector.broadcast %58 : vector<1x64xf32> to vector<2x64xf32>
    %60 = arith.addf %57, %59 : vector<2x64xf32>
    %cst_29 = arith.constant 0.000000e+00 : f32
    %61 = vector.broadcast %cst_29 : f32 to vector<2x64xf32>
    %62 = arith.maximumf %60, %61 : vector<2x64xf32>
    %c0_30 = arith.constant 0 : index
    %c0_31 = arith.constant 0 : index
    %63 = vector.load %arg4[%c0_30, %c0_31] : memref<4x64xf32, #tpu.memory_space<vmem>>, vector<1x64xf32>
    %64 = vector.broadcast %63 : vector<1x64xf32> to vector<2x64xf32>
    %65 = arith.mulf %62, %64 : vector<2x64xf32>
    %cst_32 = arith.constant dense<0.000000e+00> : vector<2xf32>
    %66 = vector.multi_reduction <add>, %65, %cst_32 [1] : vector<2x64xf32> to vector<2xf32>
    %67 = vector.shape_cast %66 : vector<2xf32> to vector<2x1xf32>
    %c1_33 = arith.constant 1 : index
    %c0_34 = arith.constant 0 : index
    %68 = vector.load %arg4[%c1_33, %c0_34] : memref<4x64xf32, #tpu.memory_space<vmem>>, vector<1x64xf32>
    %69 = vector.broadcast %68 : vector<1x64xf32> to vector<2x64xf32>
    %70 = arith.mulf %62, %69 : vector<2x64xf32>
    %cst_35 = arith.constant dense<0.000000e+00> : vector<2xf32>
    %71 = vector.multi_reduction <add>, %70, %cst_35 [1] : vector<2x64xf32> to vector<2xf32>
    %72 = vector.shape_cast %71 : vector<2xf32> to vector<2x1xf32>
    %c2_36 = arith.constant 2 : index
    %c0_37 = arith.constant 0 : index
    %73 = vector.load %arg4[%c2_36, %c0_37] : memref<4x64xf32, #tpu.memory_space<vmem>>, vector<1x64xf32>
    %74 = vector.broadcast %73 : vector<1x64xf32> to vector<2x64xf32>
    %75 = arith.mulf %62, %74 : vector<2x64xf32>
    %cst_38 = arith.constant dense<0.000000e+00> : vector<2xf32>
    %76 = vector.multi_reduction <add>, %75, %cst_38 [1] : vector<2x64xf32> to vector<2xf32>
    %77 = vector.shape_cast %76 : vector<2xf32> to vector<2x1xf32>
    %c3_39 = arith.constant 3 : index
    %c0_40 = arith.constant 0 : index
    %78 = vector.load %arg4[%c3_39, %c0_40] : memref<4x64xf32, #tpu.memory_space<vmem>>, vector<1x64xf32>
    %79 = vector.broadcast %78 : vector<1x64xf32> to vector<2x64xf32>
    %80 = arith.mulf %62, %79 : vector<2x64xf32>
    %cst_41 = arith.constant dense<0.000000e+00> : vector<2xf32>
    %81 = vector.multi_reduction <add>, %80, %cst_41 [1] : vector<2x64xf32> to vector<2xf32>
    %82 = vector.shape_cast %81 : vector<2xf32> to vector<2x1xf32>
    %83 = tpu.concatenate %67, %72, %77, %82 in 1 : vector<2x1xf32>, vector<2x1xf32>, vector<2x1xf32>, vector<2x1xf32> -> vector<2x4xf32>
    %c0_42 = arith.constant 0 : index
    %c0_43 = arith.constant 0 : index
    %84 = vector.load %arg5[%c0_42, %c0_43] : memref<1x4xf32, #tpu.memory_space<vmem>>, vector<1x4xf32>
    %85 = vector.broadcast %84 : vector<1x4xf32> to vector<2x4xf32>
    %86 = arith.addf %83, %85 : vector<2x4xf32>
    %87 = vector.extract_strided_slice %86 {offsets = [0, 0], sizes = [1, 4], strides = [1, 1]} : vector<2x4xf32> to vector<1x4xf32>
    %88 = vector.extract_strided_slice %86 {offsets = [1, 0], sizes = [1, 4], strides = [1, 1]} : vector<2x4xf32> to vector<1x4xf32>
    %89 = arith.addf %87, %88 : vector<1x4xf32>
    %cst_44 = arith.constant dense<0xFF800000> : vector<1xf32>
    %90 = vector.multi_reduction <maximumf>, %89, %cst_44 [1] : vector<1x4xf32> to vector<1xf32>
    %91 = vector.shape_cast %90 : vector<1xf32> to vector<1x1xf32>
    %92 = vector.broadcast %91 : vector<1x1xf32> to vector<1x4xf32>
    %93 = arith.subf %89, %92 : vector<1x4xf32>
    %94 = math.exp %93 : vector<1x4xf32>
    %cst_45 = arith.constant dense<0.000000e+00> : vector<1xf32>
    %95 = vector.multi_reduction <add>, %94, %cst_45 [1] : vector<1x4xf32> to vector<1xf32>
    %96 = vector.shape_cast %95 : vector<1xf32> to vector<1x1xf32>
    %97 = vector.broadcast %96 : vector<1x1xf32> to vector<1x4xf32>
    %98 = arith.divf %94, %97 : vector<1x4xf32>
    %c0_46 = arith.constant 0 : index
    %c0_47 = arith.constant 0 : index
    %c0_48 = arith.constant 0 : index
    %99 = vector.load %arg1[%c0_46, %c0_47, %c0_48] : memref<1x4x16xf32, #tpu.memory_space<vmem>>, vector<1x1x16xf32>
    %100 = vector.shape_cast %99 : vector<1x1x16xf32> to vector<1x16xf32>
    %101 = vector.extract_strided_slice %98 {offsets = [0, 0], sizes = [1, 1], strides = [1, 1]} : vector<1x4xf32> to vector<1x1xf32>
    %102 = vector.broadcast %101 : vector<1x1xf32> to vector<1x16xf32>
    %103 = arith.mulf %100, %102 : vector<1x16xf32>
    %c0_49 = arith.constant 0 : index
    %c0_50 = arith.constant 0 : index
    %c0_51 = arith.constant 0 : index
    %104 = vector.load %arg6[%c0_49, %c0_50, %c0_51] : memref<1x4x16xf32, #tpu.memory_space<vmem>>, vector<1x1x16xf32>
    %105 = vector.shape_cast %104 : vector<1x1x16xf32> to vector<1x16xf32>
    %106 = vector.shape_cast %103 : vector<1x16xf32> to vector<1x1x16xf32>
    tpu.vector_store %arg6[%c0_49, %c0_50, %c0_51], %106 {strides = array<i32>} : memref<1x4x16xf32, #tpu.memory_space<vmem>>, vector<1x1x16xf32>,
    %c0_52 = arith.constant 0 : index
    %c1_53 = arith.constant 1 : index
    %c0_54 = arith.constant 0 : index
    %107 = vector.load %arg1[%c0_52, %c1_53, %c0_54] : memref<1x4x16xf32, #tpu.memory_space<vmem>>, vector<1x1x16xf32>
    %108 = vector.shape_cast %107 : vector<1x1x16xf32> to vector<1x16xf32>
    %109 = vector.extract_strided_slice %98 {offsets = [0, 1], sizes = [1, 1], strides = [1, 1]} : vector<1x4xf32> to vector<1x1xf32>
    %110 = vector.broadcast %109 : vector<1x1xf32> to vector<1x16xf32>
    %111 = arith.mulf %108, %110 : vector<1x16xf32>
    %c0_55 = arith.constant 0 : index
    %c1_56 = arith.constant 1 : index
    %c0_57 = arith.constant 0 : index
    %112 = vector.load %arg6[%c0_55, %c1_56, %c0_57] : memref<1x4x16xf32, #tpu.memory_space<vmem>>, vector<1x1x16xf32>
    %113 = vector.shape_cast %112 : vector<1x1x16xf32> to vector<1x16xf32>
    %114 = vector.shape_cast %111 : vector<1x16xf32> to vector<1x1x16xf32>
    tpu.vector_store %arg6[%c0_55, %c1_56, %c0_57], %114 {strides = array<i32>} : memref<1x4x16xf32, #tpu.memory_space<vmem>>, vector<1x1x16xf32>,
    %c0_58 = arith.constant 0 : index
    %c2_59 = arith.constant 2 : index
    %c0_60 = arith.constant 0 : index
    %115 = vector.load %arg1[%c0_58, %c2_59, %c0_60] : memref<1x4x16xf32, #tpu.memory_space<vmem>>, vector<1x1x16xf32>
    %116 = vector.shape_cast %115 : vector<1x1x16xf32> to vector<1x16xf32>
    %117 = vector.extract_strided_slice %98 {offsets = [0, 2], sizes = [1, 1], strides = [1, 1]} : vector<1x4xf32> to vector<1x1xf32>
    %118 = vector.broadcast %117 : vector<1x1xf32> to vector<1x16xf32>
    %119 = arith.mulf %116, %118 : vector<1x16xf32>
    %c0_61 = arith.constant 0 : index
    %c2_62 = arith.constant 2 : index
    %c0_63 = arith.constant 0 : index
    %120 = vector.load %arg6[%c0_61, %c2_62, %c0_63] : memref<1x4x16xf32, #tpu.memory_space<vmem>>, vector<1x1x16xf32>
    %121 = vector.shape_cast %120 : vector<1x1x16xf32> to vector<1x16xf32>
    %122 = vector.shape_cast %119 : vector<1x16xf32> to vector<1x1x16xf32>
    tpu.vector_store %arg6[%c0_61, %c2_62, %c0_63], %122 {strides = array<i32>} : memref<1x4x16xf32, #tpu.memory_space<vmem>>, vector<1x1x16xf32>,
    %c0_64 = arith.constant 0 : index
    %c3_65 = arith.constant 3 : index
    %c0_66 = arith.constant 0 : index
    %123 = vector.load %arg1[%c0_64, %c3_65, %c0_66] : memref<1x4x16xf32, #tpu.memory_space<vmem>>, vector<1x1x16xf32>
    %124 = vector.shape_cast %123 : vector<1x1x16xf32> to vector<1x16xf32>
    %125 = vector.extract_strided_slice %98 {offsets = [0, 3], sizes = [1, 1], strides = [1, 1]} : vector<1x4xf32> to vector<1x1xf32>
    %126 = vector.broadcast %125 : vector<1x1xf32> to vector<1x16xf32>
    %127 = arith.mulf %124, %126 : vector<1x16xf32>
    %c0_67 = arith.constant 0 : index
    %c3_68 = arith.constant 3 : index
    %c0_69 = arith.constant 0 : index
    %128 = vector.load %arg6[%c0_67, %c3_68, %c0_69] : memref<1x4x16xf32, #tpu.memory_space<vmem>>, vector<1x1x16xf32>
    %129 = vector.shape_cast %128 : vector<1x1x16xf32> to vector<1x16xf32>
    %130 = vector.shape_cast %127 : vector<1x16xf32> to vector<1x1x16xf32>
    tpu.vector_store %arg6[%c0_67, %c3_68, %c0_69], %130 {strides = array<i32>} : memref<1x4x16xf32, #tpu.memory_space<vmem>>, vector<1x1x16xf32>,
    return
  }
  func.func @transform_0(%arg0: i32) -> (i32, i32, i32) {
    %c0_i32 = arith.constant 0 : i32
    %c0_i32_0 = arith.constant 0 : i32
    %c0_i32_1 = arith.constant 0 : i32
    return %arg0, %c0_i32, %c0_i32_0 : i32, i32, i32
  }
  func.func @transform_1(%arg0: i32) -> (i32, i32) {
    %c0_i32 = arith.constant 0 : i32
    %c0_i32_0 = arith.constant 0 : i32
    %c0_i32_1 = arith.constant 0 : i32
    return %c0_i32, %c0_i32_0 : i32, i32
  }
  func.func @transform_2(%arg0: i32) -> (i32, i32) {
    %c0_i32 = arith.constant 0 : i32
    %c0_i32_0 = arith.constant 0 : i32
    %c0_i32_1 = arith.constant 0 : i32
    return %c0_i32, %c0_i32_0 : i32, i32
  }
  func.func @transform_3(%arg0: i32) -> (i32, i32) {
    %c0_i32 = arith.constant 0 : i32
    %c0_i32_0 = arith.constant 0 : i32
    %c0_i32_1 = arith.constant 0 : i32
    return %c0_i32, %c0_i32_0 : i32, i32
  }
  func.func @transform_4(%arg0: i32) -> (i32, i32) {
    %c0_i32 = arith.constant 0 : i32
    %c0_i32_0 = arith.constant 0 : i32
    %c0_i32_1 = arith.constant 0 : i32
    return %c0_i32, %c0_i32_0 : i32, i32
  }
  func.func @transform_5(%arg0: i32) -> (i32, i32, i32) {
    %c0_i32 = arith.constant 0 : i32
    %c0_i32_0 = arith.constant 0 : i32
    %c0_i32_1 = arith.constant 0 : i32
    return %arg0, %c0_i32, %c0_i32_0 : i32, i32, i32
  }
}

</mosaic_0001>

<llo_original>
// kernel: channel_attention.1
$region0: #{channel_attention.1}
  #allocation0 [shape = 'u32[]', space=smem, size = 0x4, offset = 0x4, fixed_abs, tag = 'smem constant byte address 0x4 - core index']
  #allocation1 [shape = 'u32[144,128]{1,0:T(1,128)}', space=vmem, size = 0x12000, scoped, tag = 'internal scratch']
  %s0 = inlined_call_operand.hbm [shape: f32[2,4,16], index: 0, kind: input, shape index: {}]
  %s1 = inlined_call_operand.vmem [shape: f32[4,64], index: 1, kind: input, shape index: {}]
  %s2 = inlined_call_operand.vmem [shape: f32[1,64], index: 2, kind: input, shape index: {}]
  %s3 = inlined_call_operand.vmem [shape: f32[4,64], index: 3, kind: input, shape index: {}]
  %s4 = inlined_call_operand.vmem [shape: f32[1,4], index: 4, kind: input, shape index: {}]
  %s5 = inlined_call_operand.hbm [shape: f32[2,4,16], index: 5, kind: output, shape index: {}]
  %s6 = sld [smem:[#allocation0]]
  $region57: #{channel_attention.1} parent=0
    _
  %s8 = ssub.s32 1, %s6
  %s9 = scalar_select 0, %s8, %s6
  $region1: #{channel_attention.1} parent=0
    #allocation2 [shape = 'u8[4096]{0}', space=vmem, size = 0x1000, scoped, tag = 'input window, operand 0']
    #allocation3 [shape = 's32[2]{0}', space=sflag, size = 0x8, scoped, tag = 'scoped memory for channel_attention.1']
    #allocation4 [shape = 's32[2]{0}', space=sflag, size = 0x8, scoped, tag = 'scoped memory for channel_attention.1']
    #allocation5 [shape = 'u8[4096]{0}', space=vmem, size = 0x1000, scoped, tag = 'output window, operand 0']
    %10 = vsyncpa [#allocation3], 0
    %s11 = scalar_lea.sflag [#allocation3], 1
    %12 = vsyncpa %s11, 0
    %13 = vsyncpa [#allocation4], 0
    %s14 = scalar_lea.sflag [#allocation4], 1
    %15 = vsyncpa %s14, 0
    loop: start=0, step=1, limit=4
    $region2: #{channel_attention.1} parent=1 // loop_pre_header
      _
    $region3: #{channel_attention.1} parent=1 // loop_header
      %s17 = sphi 0, %s21
      %p18 = scmp.ge.s32.totalorder %s17, 4
      %s27 = sphi 0, %s29
      %s30 = sphi 0, %s27
      %s31 = sphi 0, %s30
      %s47 = sphi 0, %s31
      %s51 = sphi 0, %s51
      %s53 = sphi 0, %s51
      %s54 = sphi 0, %s53
      %s68 = sphi 0, %s54
      %s72 = sphi 0, %s72
      %s74 = sphi 0, %s72
      %s75 = sphi 0, %s74
      %s89 = sphi 0, %s75
      %s93 = sphi 0, %s93
      %s95 = sphi 0, %s93
      %s96 = sphi 0, %s95
      %s110 = sphi 0, %s96
      %s114 = sphi 0, %s114
      %s116 = sphi 0, %s114
      %s117 = sphi 0, %s116
      %s131 = sphi 0, %s117
      %s137 = sphi 0, %s139
      %s140 = sphi 0, %s137
      %s141 = sphi 0, %s140
      %s157 = sphi 0, %s141
    $region4: #{channel_attention.1} parent=1 // loop_header_branch
      %20 = sbr.rel (%p18) target = $region8
    $region5: #{channel_attention.1} parent=1 // loop_body
      %s22 = ssub.s32 %s17, 1
      %s23 = ssub.s32 %s17, 2
      %s24 = sadd.s32 %s17, 1
      %s25 = ssub.s32 %s17, %s24
      %p26 = scmp.eq.s32.totalorder %s25, 0
      %s28 = sadd.s32 %s27, 1
      %s29 = scalar_select %p26, %s27, %s28
      %p32 = pneg %p26
      %p33 = scmp.eq.s32.totalorder %s17, 1
      %p34 = por %p32, %p33
      %p35 = scmp.ne.s32.totalorder %s27, %s30
      %p36 = scmp.eq.s32.totalorder %s17, 0
      %p37 = por %p35, %p36
      %p38 = scmp.ne.s32.totalorder %s27, %s30
      %p39 = scmp.eq.s32.totalorder %s22, 1
      %p40 = por %p38, %p39
      %p41 = scmp.ne.s32.totalorder %s30, %s31
      %p42 = scmp.eq.s32.totalorder %s22, 0
      %p43 = por %p41, %p42
      %p44 = scmp.ne.s32.totalorder %s30, %s31
      %p45 = scmp.eq.s32.totalorder %s23, 1
      %p46 = por %p44, %p45
      %p48 = scmp.ne.s32.totalorder %s31, %s47
      %p49 = scmp.eq.s32.totalorder %s23, 0
      %p50 = por %p48, %p49
      %s52 = sadd.s32 %s51, 1
      %p55 = scmp.eq.s32.totalorder %s17, 1
      %p56 = scmp.ne.s32.totalorder %s51, %s53
      %p57 = scmp.eq.s32.totalorder %s17, 0
      %p58 = por %p56, %p57
      %p59 = scmp.ne.s32.totalorder %s51, %s53
      %p60 = scmp.eq.s32.totalorder %s22, 1
      %p61 = por %p59, %p60
      %p62 = scmp.ne.s32.totalorder %s53, %s54
      %p63 = scmp.eq.s32.totalorder %s22, 0
      %p64 = por %p62, %p63
      %p65 = scmp.ne.s32.totalorder %s53, %s54
      %p66 = scmp.eq.s32.totalorder %s23, 1
      %p67 = por %p65, %p66
      %p69 = scmp.ne.s32.totalorder %s54, %s68
      %p70 = scmp.eq.s32.totalorder %s23, 0
      %p71 = por %p69, %p70
      %s73 = sadd.s32 %s72, 1
      %p76 = scmp.eq.s32.totalorder %s17, 1
      %p77 = scmp.ne.s32.totalorder %s72, %s74
      %p78 = scmp.eq.s32.totalorder %s17, 0
      %p79 = por %p77, %p78
      %p80 = scmp.ne.s32.totalorder %s72, %s74
      %p81 = scmp.eq.s32.totalorder %s22, 1
      %p82 = por %p80, %p81
      %p83 = scmp.ne.s32.totalorder %s74, %s75
      %p84 = scmp.eq.s32.totalorder %s22, 0
      %p85 = por %p83, %p84
      %p86 = scmp.ne.s32.totalorder %s74, %s75
      %p87 = scmp.eq.s32.totalorder %s23, 1
      %p88 = por %p86, %p87
      %p90 = scmp.ne.s32.totalorder %s75, %s89
      %p91 = scmp.eq.s32.totalorder %s23, 0
      %p92 = por %p90, %p91
      %s94 = sadd.s32 %s93, 1
      %p97 = scmp.eq.s32.totalorder %s17, 1
      %p98 = scmp.ne.s32.totalorder %s93, %s95
      %p99 = scmp.eq.s32.totalorder %s17, 0
      %p100 = por %p98, %p99
      %p101 = scmp.ne.s32.totalorder %s93, %s95
      %p102 = scmp.eq.s32.totalorder %s22, 1
      %p103 = por %p101, %p102
      %p104 = scmp.ne.s32.totalorder %s95, %s96
      %p105 = scmp.eq.s32.totalorder %s22, 0
      %p106 = por %p104, %p105
      %p107 = scmp.ne.s32.totalorder %s95, %s96
      %p108 = scmp.eq.s32.totalorder %s23, 1
      %p109 = por %p107, %p108
      %p111 = scmp.ne.s32.totalorder %s96, %s110
      %p112 = scmp.eq.s32.totalorder %s23, 0
      %p113 = por %p111, %p112
      %s115 = sadd.s32 %s114, 1
      %p118 = scmp.eq.s32.totalorder %s17, 1
      %p119 = scmp.ne.s32.totalorder %s114, %s116
      %p120 = scmp.eq.s32.totalorder %s17, 0
      %p121 = por %p119, %p120
      %p122 = scmp.ne.s32.totalorder %s114, %s116
      %p123 = scmp.eq.s32.totalorder %s22, 1
      %p124 = por %p122, %p123
      %p125 = scmp.ne.s32.totalorder %s116, %s117
      %p126 = scmp.eq.s32.totalorder %s22, 0
      %p127 = por %p125, %p126
      %p128 = scmp.ne.s32.totalorder %s116, %s117
      %p129 = scmp.eq.s32.totalorder %s23, 1
      %p130 = por %p128, %p129
      %p132 = scmp.ne.s32.totalorder %s117, %s131
      %p133 = scmp.eq.s32.totalorder %s23, 0
      %p134 = por %p132, %p133
      %s135 = ssub.s32 %s17, %s24
      %p136 = scmp.eq.s32.totalorder %s135, 0
      %s138 = sadd.s32 %s137, 1
      %s139 = scalar_select %p136, %s137, %s138
      %p142 = pneg %p136
      %p143 = scmp.eq.s32.totalorder %s17, 1
      %p144 = por %p142, %p143
      %p145 = scmp.ne.s32.totalorder %s137, %s140
      %p146 = scmp.eq.s32.totalorder %s17, 0
      %p147 = por %p145, %p146
      %p148 = scmp.ne.s32.totalorder %s137, %s140
      %p149 = scmp.eq.s32.totalorder %s22, 1
      %p150 = por %p148, %p149
      %p151 = scmp.ne.s32.totalorder %s140, %s141
      %p152 = scmp.eq.s32.totalorder %s22, 0
      %p153 = por %p151, %p152
      %p154 = scmp.ne.s32.totalorder %s140, %s141
      %p155 = scmp.eq.s32.totalorder %s23, 1
      %p156 = por %p154, %p155
      %p158 = scmp.ne.s32.totalorder %s141, %s157
      %p159 = scmp.eq.s32.totalorder %s23, 0
      %p160 = por %p158, %p159
      %p161 = scmp.le.s32.totalorder 1, %s17
      %p162 = scmp.lt.s32.totalorder %s17, 3
      %p163 = pnand %p161, %p162
      %p164 = pneg %p163
      // Predicated region
      $region9: #{channel_attention.1} parent=5 // pred_check
        _
      $region10: #{channel_attention.1} parent=5 // pred_check_branch
        %166 = sbr.rel (%p163) target = $region12
      $region11: #{channel_attention.1} parent=5 // pred_region
        %s167 = ssub.s32 %s17, 1
        // Predicated region
        $region13: #{channel_attention.1} parent=11 // pred_check
          %p168 = pneg %p64
        $region14: #{channel_attention.1} parent=11 // pred_check_branch
          %170 = sbr.rel (%p168) target = $region16
        $region15: #{channel_attention.1} parent=11 // pred_region
          _
        $region16: #{channel_attention.1} parent=11 // pred_fallthru
          _
        // Predicated region
        $region17: #{channel_attention.1} parent=11 // pred_check
          %p171 = pneg %p85
        $region18: #{channel_attention.1} parent=11 // pred_check_branch
          %173 = sbr.rel (%p171) target = $region20
        $region19: #{channel_attention.1} parent=11 // pred_region
          _
        $region20: #{channel_attention.1} parent=11 // pred_fallthru
          _
        // Predicated region
        $region21: #{channel_attention.1} parent=11 // pred_check
          %p174 = pneg %p106
        $region22: #{channel_attention.1} parent=11 // pred_check_branch
          %176 = sbr.rel (%p174) target = $region24
        $region23: #{channel_attention.1} parent=11 // pred_region
          _
        $region24: #{channel_attention.1} parent=11 // pred_fallthru
          _
        // Predicated region
        $region25: #{channel_attention.1} parent=11 // pred_check
          %p177 = pneg %p127
        $region26: #{channel_attention.1} parent=11 // pred_check_branch
          %179 = sbr.rel (%p177) target = $region28
        $region27: #{channel_attention.1} parent=11 // pred_region
          _
        $region28: #{channel_attention.1} parent=11 // pred_fallthru
          _
      $region12: #{channel_attention.1} parent=5 // pred_fallthru
        _
      %p180 = scmp.lt.s32.totalorder %s17, 2
      // Predicated region
      $region29: #{channel_attention.1} parent=5 // pred_check
        %p181 = pneg %p180
      $region30: #{channel_attention.1} parent=5 // pred_check_branch
        %183 = sbr.rel (%p181) target = $region32
      $region31: #{channel_attention.1} parent=5 // pred_region
        // Predicated region
        $region33: #{channel_attention.1} parent=31 // pred_check
          %p184 = pneg %p37
        $region34: #{channel_attention.1} parent=31 // pred_check_branch
          %186 = sbr.rel (%p184) target = $region36
        $region35: #{channel_attention.1} parent=31 // pred_region
          %s187 = sand.u32 %s27, 1
          %s188 = scalar_lea.sflag [#allocation3], %s187
          %s189 = sand.u32 %s27, 1
          %s190 = smul.addr %s189, 4
          %s191 = scalar_lea.vmem [#allocation2], %s190
          %s193 = ssub.s32 64, 64
          %194 = vsyncadd %s188, %s193
          %s195 = smul.addr %s17, 64
          %s196 = scalar_lea.hbm %s0, %s195
          %s198 = sshll.u32 %s191, 4
          %s199 = int_to_ptr.vmem [resolvable:$true] %s198
          %201 = dma.hbm_to_vmem [thread:$0]  %s196, 64, %s199, %s188
        $region36: #{channel_attention.1} parent=31 // pred_fallthru
          _
      $region32: #{channel_attention.1} parent=5 // pred_fallthru
        _
      %p202 = scmp.le.s32.totalorder 1, %s17
      %p203 = scmp.lt.s32.totalorder %s17, 3
      %p204 = pnand %p202, %p203
      %p205 = pneg %p204
      // Predicated region
      $region37: #{channel_attention.1} parent=5 // pred_check
        _
      $region38: #{channel_attention.1} parent=5 // pred_check_branch
        %207 = sbr.rel (%p204) target = $region40
      $region39: #{channel_attention.1} parent=5 // pred_region
        %s208 = ssub.s32 %s17, 1
        %s209 = sand.u32 %s30, 1
        %s210 = scalar_lea.sflag [#allocation3], %s209
        %s211 = sand.u32 %s30, 1
        %s212 = smul.addr %s211, 4
        %s213 = scalar_lea.vmem [#allocation2], %s212
        // Predicated region
        $region41: #{channel_attention.1} parent=39 // pred_check
          %p214 = pneg %p43
        $region42: #{channel_attention.1} parent=39 // pred_check_branch
          %216 = sbr.rel (%p214) target = $region44
        $region43: #{channel_attention.1} parent=39 // pred_region
          %217 = dma.done %s210, 64
        $region44: #{channel_attention.1} parent=39 // pred_fallthru
          _
        %s218 = sand.u32 %s30, 1
        %s219 = scalar_lea.sflag [#allocation3], %s218
        %s220 = sand.u32 %s30, 1
        %s221 = smul.addr %s220, 4
        %s222 = scalar_lea.vmem [#allocation2], %s221
        %p223 = pneg %p43
        %p224 = pneg %p40
        %p225 = pneg %p64
        %p226 = pneg %p61
        %p227 = pneg %p85
        %p228 = pneg %p82
        %p229 = pneg %p106
        %p230 = pneg %p103
        %p231 = pneg %p127
        %p232 = pneg %p124
        %p233 = pneg %p153
        %p234 = pneg %p150
        %s235 = sand.u32 %s140, 1
        %s236 = scalar_lea.sflag [#allocation4], %s235
        %s237 = sand.u32 %s140, 1
        %s238 = smul.addr %s237, 4
        %s239 = scalar_lea.vmem [#allocation5], %s238
        %v240 = vld [vmem:[%s213] sm:$0x1]
        %vm241 = vcmask 122880
        %v242 = vsel %vm241, %v240, 0.0
        %243 = vadd.xlane.f32.xlu0 %v242
        %v244 = vpop.xlane.xlu0 %243
        %v245 = vmul.f32 %v244, 0.0625
        %v246 = vsel %vm241, %v240, -inf
        %247 = vmax.xlane.f32.xlu0 %v246
        %v248 = vpop.xlane.xlu0 %247
        %v249 = vld [vmem:[%s213 + $0x1] sm:$0x1]
        %v250 = vsel %vm241, %v249, 0.0
        %251 = vadd.xlane.f32.xlu0 %v250
        %v252 = vpop.xlane.xlu0 %251
        %v253 = vmul.f32 %v252, 0.0625
        %v254 = vsel %vm241, %v249, -inf
        %255 = vmax.xlane.f32.xlu0 %v254
        %v256 = vpop.xlane.xlu0 %255
        %v257 = vld [vmem:[%s213 + $0x2] sm:$0x1]
        %v258 = vsel %vm241, %v257, 0.0
        %259 = vadd.xlane.f32.xlu0 %v258
        %v260 = vpop.xlane.xlu0 %259
        %v261 = vmul.f32 %v260, 0.0625
        %v262 = vsel %vm241, %v257, -inf
        %263 = vmax.xlane.f32.xlu0 %v262
        %v264 = vpop.xlane.xlu0 %263
        %v265 = vld [vmem:[%s213 + $0x3] sm:$0x1]
        %v266 = vsel %vm241, %v265, 0.0
        %267 = vadd.xlane.f32.xlu0 %v266
        %v268 = vpop.xlane.xlu0 %267
        %v269 = vmul.f32 %v268, 0.0625
        %v270 = vsel %vm241, %v265, -inf
        %271 = vmax.xlane.f32.xlu0 %v270
        %v272 = vpop.xlane.xlu0 %271
        %vm273 = vcmask 7168
        %v274 = vsel %vm273, %v245, %v253
        %vm275 = vcmask 15360
        %v276 = vsel %vm275, %v274, %v261
        %vm277 = vcmask 23552
        %v278 = vsel %vm277, %v276, %v269
        %v279 = vsel %vm273, %v248, %v256
        %v280 = vsel %vm275, %v279, %v264
        %v281 = vsel %vm277, %v280, %v272
        %v283 = vrot.slane %v281, 7
        %vm285 = vcmask 1040384
        %v286 = vsel %vm285, %v278, %v283
        %v287 = vld [vmem:[%s1] sm:$0x1]
        %289 = vset.pattern.permute.xlu0 0
        %290 = vperm.xlu0 %289, %v286
        %v291 = vpop.permute.xlu0 %290
        %v293 = vlaneseq
        %v294 = vshrl.u32 %v293, 7
        %v295 = vsub.s32 0, %v294
        %v296 = vrot.slane %v287, %v295
        %v297 = vmul.f32 %v291, %v296
        %v298 = vld [vmem:[%s1 + $0x1] sm:$0x1]
        %299 = vset.pattern.permute.xlu0 1
        %300 = vperm.xlu0 %299, %v286
        %v301 = vpop.permute.xlu0 %300
        %v303 = vlaneseq
        %v304 = vshrl.u32 %v303, 7
        %v305 = vsub.s32 0, %v304
        %v306 = vrot.slane %v298, %v305
        %v307 = vmul.f32 %v301, %v306
        %v308 = vadd.f32 %v297, %v307
        %v309 = vld [vmem:[%s1 + $0x2] sm:$0x1]
        %310 = vset.pattern.permute.xlu0 2
        %311 = vperm.xlu0 %310, %v286
        %v312 = vpop.permute.xlu0 %311
        %v314 = vlaneseq
        %v315 = vshrl.u32 %v314, 7
        %v316 = vsub.s32 0, %v315
        %v317 = vrot.slane %v309, %v316
        %v318 = vmul.f32 %v312, %v317
        %v319 = vadd.f32 %v308, %v318
        %v320 = vld [vmem:[%s1 + $0x3] sm:$0x1]
        %321 = vset.pattern.permute.xlu0 3
        %322 = vperm.xlu0 %321, %v286
        %v323 = vpop.permute.xlu0 %322
        %v325 = vlaneseq
        %v326 = vshrl.u32 %v325, 7
        %v327 = vsub.s32 0, %v326
        %v328 = vrot.slane %v320, %v327
        %v329 = vmul.f32 %v323, %v328
        %v330 = vadd.f32 %v319, %v329
        %v331 = vld [vmem:[%s2] sm:$0x1]
        %v333 = vlaneseq
        %v334 = vshrl.u32 %v333, 7
        %v335 = vsub.s32 0, %v334
        %v336 = vrot.slane %v331, %v335
        %v338 = vadd.f32 %v330, %v336
        %v339 = vmax.f32 %v338, 0.0
        %v340 = vld [vmem:[%s3] sm:$0x1]
        %v341 = vlaneseq
        %v342 = vshrl.u32 %v341, 7
        %v343 = vsub.s32 0, %v342
        %v344 = vrot.slane %v340, %v343
        %v345 = vmul.f32 %v339, %v344
        %vm346 = vcmask 517120
        %v347 = vsel %vm346, %v345, 0.0
        %348 = vadd.xlane.f32.xlu0 %v347
        %v349 = vpop.xlane.xlu0 %348
        %v350 = vld [vmem:[%s3 + $0x1] sm:$0x1]
        %v351 = vlaneseq
        %v352 = vshrl.u32 %v351, 7
        %v353 = vsub.s32 0, %v352
        %v354 = vrot.slane %v350, %v353
        %v355 = vmul.f32 %v339, %v354
        %v356 = vsel %vm346, %v355, 0.0
        %357 = vadd.xlane.f32.xlu0 %v356
        %v358 = vpop.xlane.xlu0 %357
        %v359 = vld [vmem:[%s3 + $0x2] sm:$0x1]
        %v360 = vlaneseq
        %v361 = vshrl.u32 %v360, 7
        %v362 = vsub.s32 0, %v361
        %v363 = vrot.slane %v359, %v362
        %v364 = vmul.f32 %v339, %v363
        %v365 = vsel %vm346, %v364, 0.0
        %366 = vadd.xlane.f32.xlu0 %v365
        %v367 = vpop.xlane.xlu0 %366
        %v368 = vld [vmem:[%s3 + $0x3] sm:$0x1]
        %v369 = vlaneseq
        %v370 = vshrl.u32 %v369, 7
        %v371 = vsub.s32 0, %v370
        %v372 = vrot.slane %v368, %v371
        %v373 = vmul.f32 %v339, %v372
        %v374 = vsel %vm346, %v373, 0.0
        %375 = vadd.xlane.f32.xlu0 %v374
        %v376 = vpop.xlane.xlu0 %375
        %v377 = vsel %vm273, %v349, %v358
        %v378 = vsel %vm275, %v377, %v367
        %v379 = vsel %vm277, %v378, %v376
        %v380 = vld [vmem:[%s4] sm:$0x1]
        %v382 = vlaneseq
        %v383 = vshrl.u32 %v382, 7
        %v384 = vsub.s32 0, %v383
        %v385 = vrot.slane %v380, %v384
        %v387 = vadd.f32 %v379, %v385
        %v389 = vrot.slane %v387, 1
        %v391 = vadd.f32 %v387, %v389
        %vm392 = vcmask 24576
        %v393 = vsel %vm392, %v391, -inf
        %394 = vmax.xlane.f32.xlu0 %v393
        %v395 = vpop.xlane.xlu0 %394
        %v396 = vsub.f32 %v391, %v395
        %v397 = vmul.f32 %v396, 1.442695
        %v398 = vpow.pop %v397
        %v399 = vsel %vm392, %v398, 0.0
        %400 = vadd.xlane.f32.xlu0 %v399
        %v401 = vpop.xlane.xlu0 %400
        %v402 = vrcp.pop %v401
        %v403 = vmul.f32 %v398, %v402
        %405 = vset.pattern.permute.xlu0 0
        %406 = vperm.xlu0 %405, %v403
        %v407 = vpop.permute.xlu0 %406
        %v409 = vmul.f32 %v240, %v407
        %410 = vst.msk [vmem:[%s239] sm:$0x1] %vm241, %v409
        %v411 = vld [vmem:[%s213 + $0x1] sm:$0x1]
        %412 = vset.pattern.permute.xlu0 1
        %413 = vperm.xlu0 %412, %v403
        %v414 = vpop.permute.xlu0 %413
        %v416 = vmul.f32 %v411, %v414
        %417 = vst.msk [vmem:[%s239 + $0x1] sm:$0x1] %vm241, %v416
        %v418 = vld [vmem:[%s213 + $0x2] sm:$0x1]
        %419 = vset.pattern.permute.xlu0 2
        %420 = vperm.xlu0 %419, %v403
        %v421 = vpop.permute.xlu0 %420
        %v423 = vmul.f32 %v418, %v421
        %424 = vst.msk [vmem:[%s239 + $0x2] sm:$0x1] %vm241, %v423
        %v425 = vld [vmem:[%s213 + $0x3] sm:$0x1]
        %426 = vset.pattern.permute.xlu0 3
        %427 = vperm.xlu0 %426, %v403
        %v428 = vpop.permute.xlu0 %427
        %v430 = vmul.f32 %v425, %v428
        %431 = vst.msk [vmem:[%s239 + $0x3] sm:$0x1] %vm241, %v430
        %s432 = sand.u32 %s140, 1
        %s433 = scalar_lea.sflag [#allocation4], %s432
        %s434 = sand.u32 %s140, 1
        %s435 = smul.addr %s434, 4
        %s436 = scalar_lea.vmem [#allocation5], %s435
        // Predicated region
        $region45: #{channel_attention.1} parent=39 // pred_check
          %p437 = pneg %p150
        $region46: #{channel_attention.1} parent=39 // pred_check_branch
          %439 = sbr.rel (%p437) target = $region48
        $region47: #{channel_attention.1} parent=39 // pred_region
          %s441 = ssub.s32 64, 64
          %442 = vsyncadd %s433, %s441
          %s443 = smul.addr %s22, 64
          %s444 = scalar_lea.hbm %s5, %s443
          %s446 = sshll.u32 %s436, 4
          %s447 = int_to_ptr.vmem [resolvable:$true] %s446
          %449 = dma.vmem_to_hbm [thread:$0]  %s447, 64, %s444, %s433
        $region48: #{channel_attention.1} parent=39 // pred_fallthru
          _
      $region40: #{channel_attention.1} parent=5 // pred_fallthru
        _
      %p450 = scmp.le.s32.totalorder 2, %s17
      // Predicated region
      $region49: #{channel_attention.1} parent=5 // pred_check
        %p451 = pneg %p450
      $region50: #{channel_attention.1} parent=5 // pred_check_branch
        %453 = sbr.rel (%p451) target = $region52
      $region51: #{channel_attention.1} parent=5 // pred_region
        %s454 = ssub.s32 %s17, 2
        // Predicated region
        $region53: #{channel_attention.1} parent=51 // pred_check
          %p455 = pneg %p156
        $region54: #{channel_attention.1} parent=51 // pred_check_branch
          %457 = sbr.rel (%p455) target = $region56
        $region55: #{channel_attention.1} parent=51 // pred_region
          %s458 = sand.u32 %s141, 1
          %s459 = scalar_lea.sflag [#allocation4], %s458
          %s460 = sand.u32 %s141, 1
          %s461 = smul.addr %s460, 4
          %s462 = scalar_lea.vmem [#allocation5], %s461
          %463 = dma.done %s459, 64
        $region56: #{channel_attention.1} parent=51 // pred_fallthru
          _
      $region52: #{channel_attention.1} parent=5 // pred_fallthru
        _
    $region6: #{channel_attention.1} parent=1 // loop_footer
      %s21 = sadd.s32 1, %s17
    $region7: #{channel_attention.1} parent=1 // loop_footer_branch
      %16 = sbr.rel target = $region3
    $region8: #{channel_attention.1} parent=1 // loop_exit
      _
    %464 = vsyncpa [#allocation3], 1
    %s465 = scalar_lea.sflag [#allocation3], 1
    %466 = vsyncpa %s465, 1
    %467 = vsyncpa [#allocation4], 1
    %s468 = scalar_lea.sflag [#allocation4], 1
    %469 = vsyncpa %s468, 1

</llo_original>
